<compile_context>
chip_gen: v7x
topology: tpu7x:2x2x1
jax: 0.10.0
libtpu: 0.0.40
codegen_flags: <defaults>
</compile_context>

<pallas_src>
import functools

import jax
import jax.numpy as jnp
from jax.experimental import pallas as pl
from jax.experimental.pallas import tpu as pltpu


def _round_up(x: int, m: int) -> int:
    return ((x + m - 1) // m) * m


def _cdiv(a: int, b: int) -> int:
    return -(-a // b)


def actor_mlp_kernel(x_ref, w1_ref, b1_ref, w2_ref, b2_ref, w3_ref, b3_ref,
                     mu_ref):
    """Fused MLP tile: Linear -> ReLU -> Linear -> ReLU -> Linear."""
    wdt = w1_ref.dtype  # matmul operand dtype (f32 or bf16)

    x = x_ref[...].astype(wdt)
    h1 = jnp.dot(x, w1_ref[...],
                 preferred_element_type=jnp.float32) + b1_ref[...]
    h1 = jnp.maximum(h1, 0.0)                      # f32 elementwise (v5e-safe)

    h2 = jnp.dot(h1.astype(wdt), w2_ref[...],
                 preferred_element_type=jnp.float32) + b2_ref[...]
    h2 = jnp.maximum(h2, 0.0)

    mu = jnp.dot(h2.astype(wdt), w3_ref[...],
                 preferred_element_type=jnp.float32) + b3_ref[...]
    mu_ref[...] = mu.astype(mu_ref.dtype)


def _pad2d(a, rows, cols, dtype):
    a = jnp.asarray(a)
    if a.ndim == 1:
        a = a.reshape(1, -1)
    out = jnp.zeros((rows, cols), dtype)
    return out.at[: a.shape[0], : a.shape[1]].set(a.astype(dtype))


def prepare_params(params, compute_dtype=jnp.bfloat16):
    """One-time padding/casting of PyTorch-shaped params (weights transposed).

    Only the hidden dim is padded (to a multiple of 128, lane-dense weight
    DMAs / matmuls); ob_dim and ac_dim stay at their natural sizes. Padding
    is a mathematical no-op (zero cols/rows + zero bias, ReLU(0)=0).
    """
    wdt = jnp.dtype(compute_dtype)
    ob_dim, layer_size = params["w1"].shape
    ac_dim = params["w3"].shape[1]
    Hp = _round_up(layer_size, 128)
    return {
        "w1": _pad2d(params["w1"], ob_dim, Hp, wdt),
        "b1": _pad2d(params["b1"], 1, Hp, jnp.float32),
        "w2": _pad2d(params["w2"], Hp, Hp, wdt),
        "b2": _pad2d(params["b2"], 1, Hp, jnp.float32),
        "w3": _pad2d(params["w3"], Hp, ac_dim, wdt),
        "b3": _pad2d(params["b3"], 1, ac_dim, jnp.float32),
        "log_std": jnp.asarray(params["log_std"], jnp.float32),
    }


@functools.partial(jax.jit, static_argnames=("tile_b",))
def actor_forward(state, prepared, *, tile_b: int = 1024):
    """state: (B, ob_dim) f32. prepared: output of prepare_params.

    Returns (mu: (B, ac_dim) f32, std: (ac_dim,) f32) like Actor.forward.
    """
    B, ob_dim = state.shape
    Hp = prepared["w2"].shape[0]
    ac_dim = prepared["w3"].shape[1]
    wdt = prepared["w1"].dtype

    # Balanced batch tiling: grid length >= 2 and even when B spans more than
    # one tile (v7x megacore sharding); TB always a multiple of 8.
    nt = max(1, _cdiv(B, tile_b))
    if nt > 1 and nt % 2 == 1:
        nt += 1
    TB = _round_up(_cdiv(B, nt), 8)
    BP = nt * TB

    # Only the batch dim of state is padded; the feature dim stays ob_dim.
    if BP == B:
        x_p = state
    else:
        x_p = jnp.zeros((BP, ob_dim), state.dtype).at[:B].set(state)

    # VMEM budget (bytes). Weights/biases are index-invariant; they are
    # double-buffered by default, or single-buffered (Buffered(1)) when big
    # enough for the duplicate copy to matter on v7x's 64 MiB VMEM.
    wcopy = ((ob_dim * Hp + Hp * Hp + Hp * ac_dim) * wdt.itemsize
             + (2 * Hp + ac_dim) * 4)
    single_buffer_weights = wcopy > (8 << 20)
    wbytes = wcopy * (1 if single_buffer_weights else 2)
    abytes = (2 * TB * (ob_dim * state.dtype.itemsize + ac_dim * 4)
              + 2 * TB * Hp * 4)
    vmem_limit = int(min(56 << 20, max(8 << 20, int(1.5 * (wbytes + abytes)))))

    if single_buffer_weights:
        resident = lambda shape: pl.BlockSpec(shape, lambda i: (0, 0),
                                              pipeline_mode=pl.Buffered(1))
    else:
        resident = lambda shape: pl.BlockSpec(shape, lambda i: (0, 0))

    cost = pl.CostEstimate(
        flops=2 * BP * (ob_dim * Hp + Hp * Hp + Hp * ac_dim),
        transcendentals=0,
        bytes_accessed=int(wcopy
                           + BP * (ob_dim * state.dtype.itemsize + ac_dim * 4)),
    )

    mu_p = pl.pallas_call(
        actor_mlp_kernel,
        out_shape=jax.ShapeDtypeStruct((BP, ac_dim), jnp.float32),
        grid=(nt,),
        in_specs=[
            pl.BlockSpec((TB, ob_dim), lambda i: (i, 0)),   # state: batch-tiled
            resident((ob_dim, Hp)), resident((1, Hp)),      # w1, b1 (resident)
            resident((Hp, Hp)), resident((1, Hp)),          # w2, b2
            resident((Hp, ac_dim)), resident((1, ac_dim)),  # w3, b3
        ],
        out_specs=pl.BlockSpec((TB, ac_dim), lambda i: (i, 0)),
        compiler_params=pltpu.CompilerParams(
            dimension_semantics=("parallel",),              # 2 TCs on v7x
            vmem_limit_bytes=vmem_limit),
        cost_estimate=cost,
    )(x_p, prepared["w1"], prepared["b1"], prepared["w2"], prepared["b2"],
      prepared["w3"], prepared["b3"])

    mu = mu_p[:B] if BP != B else mu_p
    std = jnp.exp(prepared["log_std"])                      # batch-independent
    return mu, std


def init_params(key, ob_dim, ac_dim, layer_size):
    """Deterministic synthetic init (nn.Linear shapes, weights transposed)."""
    k1, k2, k3, k4, k5, k6 = jax.random.split(key, 6)
    scale = lambda fan_in: 1.0 / jnp.sqrt(jnp.float32(fan_in))
    return {
        "w1": jax.random.uniform(k1, (ob_dim, layer_size), jnp.float32,
                                 -scale(ob_dim), scale(ob_dim)),
        "b1": jax.random.uniform(k2, (layer_size,), jnp.float32,
                                 -scale(ob_dim), scale(ob_dim)),
        "w2": jax.random.uniform(k3, (layer_size, layer_size), jnp.float32,
                                 -scale(layer_size), scale(layer_size)),
        "b2": jax.random.uniform(k4, (layer_size,), jnp.float32,
                                 -scale(layer_size), scale(layer_size)),
        "w3": jax.random.uniform(k5, (layer_size, ac_dim), jnp.float32,
                                 -scale(layer_size), scale(layer_size)),
        "b3": jax.random.uniform(k6, (ac_dim,), jnp.float32,
                                 -scale(layer_size), scale(layer_size)),
        # nn.Parameter(torch.zeros(ac_dim))
        "log_std": jnp.zeros((ac_dim,), jnp.float32),
    }


if __name__ == "__main__":
    ob_dim, ac_dim, layer_size = 8, 4, 32
    batch = 2

    key = jax.random.PRNGKey(0)
    k_state, k_params = jax.random.split(key)

    state = jax.random.normal(k_state, (batch, ob_dim), jnp.float32)
    params = init_params(k_params, ob_dim, ac_dim, layer_size)

    # Reference (same math as the PyTorch forward).
    h1 = jnp.maximum(state @ params["w1"] + params["b1"], 0.0)
    h2 = jnp.maximum(h1 @ params["w2"] + params["b2"], 0.0)
    mu_ref = h2 @ params["w3"] + params["b3"]
    std_ref = jnp.exp(params["log_std"])

    # Exactness check with f32 compute.
    prepared_f32 = prepare_params(params, compute_dtype=jnp.float32)
    mu, std = actor_forward(state, prepared_f32)
    jax.block_until_ready((mu, std))

    assert mu.shape == (batch, ac_dim) and std.shape == (ac_dim,)
    assert jnp.allclose(mu, mu_ref, atol=1e-5), "mu mismatch (f32)"
    assert jnp.allclose(std, std_ref, atol=1e-6), "std mismatch"

    # Default bf16 inference path (f32 accumulation); loose tolerance.
    prepared_bf16 = prepare_params(params)  # compute_dtype=bf16
    mu_bf, std_bf = actor_forward(state, prepared_bf16)
    jax.block_until_ready((mu_bf, std_bf))
    assert jnp.allclose(mu_bf, mu_ref, atol=1e-1, rtol=1e-1), "mu mismatch (bf16)"
    assert jnp.allclose(std_bf, std_ref, atol=1e-6), "std mismatch (bf16)"

    print("KERNEL_OK")
</pallas_src>

<mosaic_0001>
module attributes {stable_mosaic.version = 11 : i64} {
  func.func @actor_mlp_kernel(%arg0: i32, %arg1: memref<8x8xf32, #tpu.memory_space<vmem>>, %arg2: memref<8x128xf32, #tpu.memory_space<vmem>>, %arg3: memref<1x128xf32, #tpu.memory_space<vmem>>, %arg4: memref<128x128xf32, #tpu.memory_space<vmem>>, %arg5: memref<1x128xf32, #tpu.memory_space<vmem>>, %arg6: memref<128x4xf32, #tpu.memory_space<vmem>>, %arg7: memref<1x4xf32, #tpu.memory_space<vmem>>, %arg8: memref<8x4xf32, #tpu.memory_space<vmem>>) attributes {dimension_semantics = [#tpu.dimension_semantics<parallel>], iteration_bounds = array<i64: 1>, scalar_prefetch = 0 : i64, scratch_operands = 0 : i64, tpu.core_type = #tpu.core_type<tc>, window_params = [{transform_indices = @transform_0, window_bounds = array<i64: 8, 8>}, {pipeline_mode = #tpu.pipeline_mode<synchronous>, transform_indices = @transform_1, window_bounds = array<i64: 8, 128>}, {pipeline_mode = #tpu.pipeline_mode<synchronous>, transform_indices = @transform_2, window_bounds = array<i64: 1, 128>}, {pipeline_mode = #tpu.pipeline_mode<synchronous>, transform_indices = @transform_3, window_bounds = array<i64: 128, 128>}, {pipeline_mode = #tpu.pipeline_mode<synchronous>, transform_indices = @transform_4, window_bounds = array<i64: 1, 128>}, {pipeline_mode = #tpu.pipeline_mode<synchronous>, transform_indices = @transform_5, window_bounds = array<i64: 128, 4>}, {pipeline_mode = #tpu.pipeline_mode<synchronous>, transform_indices = @transform_6, window_bounds = array<i64: 1, 4>}, {transform_indices = @transform_7, window_bounds = array<i64: 8, 4>}]} {
    %c0 = arith.constant 0 : index
    %c0_0 = arith.constant 0 : index
    %0 = vector.load %arg1[%c0, %c0_0] : memref<8x8xf32, #tpu.memory_space<vmem>>, vector<8x8xf32>
    %c0_1 = arith.constant 0 : index
    %c0_2 = arith.constant 0 : index
    %1 = vector.load %arg2[%c0_1, %c0_2] : memref<8x128xf32, #tpu.memory_space<vmem>>, vector<8x128xf32>
    %cst = arith.constant dense<0.000000e+00> : vector<8x128xf32>
    %2 = tpu.matmul %0, %1, %cst {dimension_numbers = #tpu.dot_dimension_numbers<[1], [0], [0], [1], [0, 0, 1, 1], [], []>} : vector<8x8xf32>, vector<8x128xf32>, vector<8x128xf32> -> vector<8x128xf32>
    %c0_3 = arith.constant 0 : index
    %c0_4 = arith.constant 0 : index
    %3 = vector.load %arg3[%c0_3, %c0_4] : memref<1x128xf32, #tpu.memory_space<vmem>>, vector<1x128xf32>
    %4 = vector.broadcast %3 : vector<1x128xf32> to vector<8x128xf32>
    %5 = arith.addf %2, %4 : vector<8x128xf32>
    %cst_5 = arith.constant 0.000000e+00 : f32
    %6 = vector.broadcast %cst_5 : f32 to vector<8x128xf32>
    %7 = arith.maximumf %5, %6 : vector<8x128xf32>
    %c0_6 = arith.constant 0 : index
    %c0_7 = arith.constant 0 : index
    %8 = vector.load %arg4[%c0_6, %c0_7] : memref<128x128xf32, #tpu.memory_space<vmem>>, vector<128x128xf32>
    %cst_8 = arith.constant dense<0.000000e+00> : vector<8x128xf32>
    %9 = tpu.matmul %7, %8, %cst_8 {dimension_numbers = #tpu.dot_dimension_numbers<[1], [0], [0], [1], [0, 0, 1, 1], [], []>} : vector<8x128xf32>, vector<128x128xf32>, vector<8x128xf32> -> vector<8x128xf32>
    %c0_9 = arith.constant 0 : index
    %c0_10 = arith.constant 0 : index
    %10 = vector.load %arg5[%c0_9, %c0_10] : memref<1x128xf32, #tpu.memory_space<vmem>>, vector<1x128xf32>
    %11 = vector.broadcast %10 : vector<1x128xf32> to vector<8x128xf32>
    %12 = arith.addf %9, %11 : vector<8x128xf32>
    %cst_11 = arith.constant 0.000000e+00 : f32
    %13 = vector.broadcast %cst_11 : f32 to vector<8x128xf32>
    %14 = arith.maximumf %12, %13 : vector<8x128xf32>
    %c0_12 = arith.constant 0 : index
    %c0_13 = arith.constant 0 : index
    %15 = vector.load %arg6[%c0_12, %c0_13] : memref<128x4xf32, #tpu.memory_space<vmem>>, vector<128x4xf32>
    %cst_14 = arith.constant dense<0.000000e+00> : vector<8x4xf32>
    %16 = tpu.matmul %14, %15, %cst_14 {dimension_numbers = #tpu.dot_dimension_numbers<[1], [0], [0], [1], [0, 0, 1, 1], [], []>} : vector<8x128xf32>, vector<128x4xf32>, vector<8x4xf32> -> vector<8x4xf32>
    %c0_15 = arith.constant 0 : index
    %c0_16 = arith.constant 0 : index
    %17 = vector.load %arg7[%c0_15, %c0_16] : memref<1x4xf32, #tpu.memory_space<vmem>>, vector<1x4xf32>
    %18 = vector.broadcast %17 : vector<1x4xf32> to vector<8x4xf32>
    %19 = arith.addf %16, %18 : vector<8x4xf32>
    %c0_17 = arith.constant 0 : index
    %c0_18 = arith.constant 0 : index
    %20 = vector.load %arg8[%c0_17, %c0_18] : memref<8x4xf32, #tpu.memory_space<vmem>>, vector<8x4xf32>
    tpu.vector_store %arg8[%c0_17, %c0_18], %19 {strides = array<i32>} : memref<8x4xf32, #tpu.memory_space<vmem>>, vector<8x4xf32>,
    return
  }
  func.func @transform_0(%arg0: i32) -> (i32, i32) {
    %c0_i32 = arith.constant 0 : i32
    %c0_i32_0 = arith.constant 0 : i32
    return %arg0, %c0_i32 : i32, i32
  }
  func.func @transform_1(%arg0: i32) -> (i32, i32) {
    %c0_i32 = arith.constant 0 : i32
    %c0_i32_0 = arith.constant 0 : i32
    %c0_i32_1 = arith.constant 0 : i32
    return %c0_i32, %c0_i32_0 : i32, i32
  }
  func.func @transform_2(%arg0: i32) -> (i32, i32) {
    %c0_i32 = arith.constant 0 : i32
    %c0_i32_0 = arith.constant 0 : i32
    %c0_i32_1 = arith.constant 0 : i32
    return %c0_i32, %c0_i32_0 : i32, i32
  }
  func.func @transform_3(%arg0: i32) -> (i32, i32) {
    %c0_i32 = arith.constant 0 : i32
    %c0_i32_0 = arith.constant 0 : i32
    %c0_i32_1 = arith.constant 0 : i32
    return %c0_i32, %c0_i32_0 : i32, i32
  }
  func.func @transform_4(%arg0: i32) -> (i32, i32) {
    %c0_i32 = arith.constant 0 : i32
    %c0_i32_0 = arith.constant 0 : i32
    %c0_i32_1 = arith.constant 0 : i32
    return %c0_i32, %c0_i32_0 : i32, i32
  }
  func.func @transform_5(%arg0: i32) -> (i32, i32) {
    %c0_i32 = arith.constant 0 : i32
    %c0_i32_0 = arith.constant 0 : i32
    %c0_i32_1 = arith.constant 0 : i32
    return %c0_i32, %c0_i32_0 : i32, i32
  }
  func.func @transform_6(%arg0: i32) -> (i32, i32) {
    %c0_i32 = arith.constant 0 : i32
    %c0_i32_0 = arith.constant 0 : i32
    %c0_i32_1 = arith.constant 0 : i32
    return %c0_i32, %c0_i32_0 : i32, i32
  }
  func.func @transform_7(%arg0: i32) -> (i32, i32) {
    %c0_i32 = arith.constant 0 : i32
    %c0_i32_0 = arith.constant 0 : i32
    return %arg0, %c0_i32 : i32, i32
  }
}

</mosaic_0001>

<llo_original>
// kernel: actor_forward.1
$region0: #{actor_forward.1}
  #allocation0 [shape = 'u32[]', space=smem, size = 0x4, offset = 0x4, fixed_abs, tag = 'smem constant byte address 0x4 - core index']
  #allocation1 [shape = 'u32[144,128]{1,0:T(1,128)}', space=vmem, size = 0x12000, scoped, tag = 'internal scratch']
  %s0 = inlined_call_operand.vmem [shape: f32[8,8], index: 0, kind: input, shape index: {}]
  %s1 = inlined_call_operand.vmem [shape: f32[8,128], index: 1, kind: input, shape index: {}]
  %s2 = inlined_call_operand.vmem [shape: f32[1,128], index: 2, kind: input, shape index: {}]
  %s3 = inlined_call_operand.vmem [shape: f32[128,128], index: 3, kind: input, shape index: {}]
  %s4 = inlined_call_operand.vmem [shape: f32[1,128], index: 4, kind: input, shape index: {}]
  %s5 = inlined_call_operand.vmem [shape: f32[128,4], index: 5, kind: input, shape index: {}]
  %s6 = inlined_call_operand.vmem [shape: f32[1,4], index: 6, kind: input, shape index: {}]
  %s7 = inlined_call_operand.vmem [shape: f32[8,4], index: 7, kind: output, shape index: {}]
  %s8 = sld [smem:[#allocation0]]
  $region38: #{actor_forward.1} parent=0
    _
  %s10 = ssub.s32 1, %s8
  %s11 = scalar_select 0, %s10, %s8
  // Predicated region
  $region2: #{actor_forward.1} parent=0 // pred_check
    _
  $region3: #{actor_forward.1} parent=0 // pred_check_branch
    %13 = sbr.rel (0) target = $region5
  $region4: #{actor_forward.1} parent=0 // pred_region
    _
  $region5: #{actor_forward.1} parent=0 // pred_fallthru
    _
  // Predicated region
  $region6: #{actor_forward.1} parent=0 // pred_check
    _
  $region7: #{actor_forward.1} parent=0 // pred_check_branch
    %15 = sbr.rel (0) target = $region9
  $region8: #{actor_forward.1} parent=0 // pred_region
    _
  $region9: #{actor_forward.1} parent=0 // pred_fallthru
    _
  // Predicated region
  $region10: #{actor_forward.1} parent=0 // pred_check
    _
  $region11: #{actor_forward.1} parent=0 // pred_check_branch
    %17 = sbr.rel (0) target = $region13
  $region12: #{actor_forward.1} parent=0 // pred_region
    _
  $region13: #{actor_forward.1} parent=0 // pred_fallthru
    _
  // Predicated region
  $region14: #{actor_forward.1} parent=0 // pred_check
    _
  $region15: #{actor_forward.1} parent=0 // pred_check_branch
    %19 = sbr.rel (0) target = $region17
  $region16: #{actor_forward.1} parent=0 // pred_region
    _
  $region17: #{actor_forward.1} parent=0 // pred_fallthru
    _
  // Predicated region
  $region18: #{actor_forward.1} parent=0 // pred_check
    _
  $region19: #{actor_forward.1} parent=0 // pred_check_branch
    %21 = sbr.rel (0) target = $region21
  $region20: #{actor_forward.1} parent=0 // pred_region
    _
  $region21: #{actor_forward.1} parent=0 // pred_fallthru
    _
  // Predicated region
  $region22: #{actor_forward.1} parent=0 // pred_check
    _
  $region23: #{actor_forward.1} parent=0 // pred_check_branch
    %23 = sbr.rel (0) target = $region25
  $region24: #{actor_forward.1} parent=0 // pred_region
    _
  $region25: #{actor_forward.1} parent=0 // pred_fallthru
    _
  // Predicated region
  $region26: #{actor_forward.1} parent=0 // pred_check
    _
  $region27: #{actor_forward.1} parent=0 // pred_check_branch
    %25 = sbr.rel (0) target = $region29
  $region28: #{actor_forward.1} parent=0 // pred_region
    _
  $region29: #{actor_forward.1} parent=0 // pred_fallthru
    _
  %v26 = vld [vmem:[%s0] sm:$0xff]
  %v27 = vld [vmem:[%s1] sm:$0xff]
  %v28 = vld [vmem:[%s2] sm:$0x1]
  %v30 = vlaneseq
  %v31 = vshrl.u32 %v30, 7
  %v32 = vsub.s32 0, %v31
  %v33 = vrot.slane %v28, %v32
  %vm35 = vcmask 64512
  %v37 = vsel %vm35, %v26, 0
  %39 = vmatprep.subr.mxu0 0.0
  %40 = vmatpush1.msra.mxu0 %v27
  %41 = vmatprep.subr.mxu0 0.0
  %42 = vmatpush1.msra.mxu0 0.0
  %43 = vmatprep.subr.mxu0 0.0
  %44 = vmatpush1.msra.mxu0 0.0
  %45 = vmatprep.subr.mxu0 0.0
  %46 = vmatpush1.msra.mxu0 0.0
  %47 = vmatprep.subr.mxu0 0.0
  %48 = vmatpush1.msra.mxu0 0.0
  %49 = vmatprep.subr.mxu0 0.0
  %50 = vmatpush1.msra.mxu0 0.0
  %51 = vmatprep.subr.mxu0 0.0
  %52 = vmatpush1.msra.mxu0 0.0
  %53 = vmatprep.subr.mxu0 0.0
  %54 = vmatpush1.msra.mxu0 0.0
  %55 = vmatprep.subr.mxu0 0.0
  %56 = vmatpush1.msra.mxu0 0.0
  %57 = vmatprep.subr.mxu0 0.0
  %58 = vmatpush1.msra.mxu0 0.0
  %59 = vmatprep.subr.mxu0 0.0
  %60 = vmatpush1.msra.mxu0 0.0
  %61 = vmatprep.subr.mxu0 0.0
  %62 = vmatpush1.msra.mxu0 0.0
  %63 = vmatprep.subr.mxu0 0.0
  %64 = vmatpush1.msra.mxu0 0.0
  %65 = vmatprep.subr.mxu0 0.0
  %66 = vmatpush1.msra.mxu0 0.0
  %67 = vmatprep.subr.mxu0 0.0
  %68 = vmatpush1.msra.mxu0 0.0
  %69 = vmatprep.subr.mxu0 0.0
  %70 = vmatpush1.msra.mxu0 0.0
  %71 = vmatprep.subr.mxu0 0.0
  %72 = vmatpush1.msra.mxu0 0.0
  %73 = vmatprep.subr.mxu0 0.0
  %74 = vmatpush1.msra.mxu0 0.0
  %75 = vmatprep.subr.mxu0 0.0
  %76 = vmatpush1.msra.mxu0 0.0
  %77 = vmatprep.subr.mxu0 0.0
  %78 = vmatpush1.msra.mxu0 0.0
  %79 = vmatprep.subr.mxu0 0.0
  %80 = vmatpush1.msra.mxu0 0.0
  %81 = vmatprep.subr.mxu0 0.0
  %82 = vmatpush1.msra.mxu0 0.0
  %83 = vmatprep.subr.mxu0 0.0
  %84 = vmatpush1.msra.mxu0 0.0
  %85 = vmatprep.subr.mxu0 0.0
  %86 = vmatpush1.msra.mxu0 0.0
  %87 = vmatprep.subr.mxu0 0.0
  %88 = vmatpush1.msra.mxu0 0.0
  %89 = vmatprep.subr.mxu0 0.0
  %90 = vmatpush1.msra.mxu0 0.0
  %91 = vmatprep.subr.mxu0 0.0
  %92 = vmatpush1.msra.mxu0 0.0
  %93 = vmatprep.subr.mxu0 0.0
  %94 = vmatpush1.msra.mxu0 0.0
  %95 = vmatprep.subr.mxu0 0.0
  %96 = vmatpush1.msra.mxu0 0.0
  %97 = vmatprep.subr.mxu0 0.0
  %98 = vmatpush1.msra.mxu0 0.0
  %99 = vmatprep.subr.mxu0 0.0
  %100 = vmatpush1.msra.mxu0 0.0
  %101 = vmatprep.subr.mxu0 0.0
  %102 = vmatpush1.msra.mxu0 0.0
  %103 = vmatprep.mubr.f32.mxu0 0.0
  %104 = vmatmul.mubr.f32.gmra.mrb[0].mxu0 %v37
  %v105 = vpop.f32.mrb[0].mxu0
  %v106 = vadd.f32 %v33, %v105
  %v107 = vpop.f32.mrb[0].mxu0
  %108 = vdwg.mxu0
  %v109 = vmax.f32 %v106, 0.0
  %v110 = vld [vmem:[%s3] sm:$0xff]
  %v111 = vld [vmem:[%s3 + $0x8] sm:$0xff]
  %v112 = vld [vmem:[%s3 + $0x10] sm:$0xff]
  %v113 = vld [vmem:[%s3 + $0x18] sm:$0xff]
  %v114 = vld [vmem:[%s3 + $0x20] sm:$0xff]
  %v115 = vld [vmem:[%s3 + $0x28] sm:$0xff]
  %v116 = vld [vmem:[%s3 + $0x30] sm:$0xff]
  %v117 = vld [vmem:[%s3 + $0x38] sm:$0xff]
  %v118 = vld [vmem:[%s3 + $0x40] sm:$0xff]
  %v119 = vld [vmem:[%s3 + $0x48] sm:$0xff]
  %v120 = vld [vmem:[%s3 + $0x50] sm:$0xff]
  %v121 = vld [vmem:[%s3 + $0x58] sm:$0xff]
  %v122 = vld [vmem:[%s3 + $0x60] sm:$0xff]
  %v123 = vld [vmem:[%s3 + $0x68] sm:$0xff]
  %v124 = vld [vmem:[%s3 + $0x70] sm:$0xff]
  %v125 = vld [vmem:[%s3 + $0x78] sm:$0xff]
  %v126 = vld [vmem:[%s4] sm:$0x1]
  %v128 = vlaneseq
  %v129 = vshrl.u32 %v128, 7
  %v130 = vsub.s32 0, %v129
  %v131 = vrot.slane %v126, %v130
  %133 = vmatprep.subr.mxu0 0.0
  %134 = vmatpush1.msra.mxu0 %v110
  %135 = vmatprep.subr.mxu0 0.0
  %136 = vmatpush1.msra.mxu0 %v111
  %137 = vmatprep.subr.mxu0 0.0
  %138 = vmatpush1.msra.mxu0 %v112
  %139 = vmatprep.subr.mxu0 0.0
  %140 = vmatpush1.msra.mxu0 %v113
  %141 = vmatprep.subr.mxu0 0.0
  %142 = vmatpush1.msra.mxu0 %v114
  %143 = vmatprep.subr.mxu0 0.0
  %144 = vmatpush1.msra.mxu0 %v115
  %145 = vmatprep.subr.mxu0 0.0
  %146 = vmatpush1.msra.mxu0 %v116
  %147 = vmatprep.subr.mxu0 0.0
  %148 = vmatpush1.msra.mxu0 %v117
  %149 = vmatprep.subr.mxu0 0.0
  %150 = vmatpush1.msra.mxu0 %v118
  %151 = vmatprep.subr.mxu0 0.0
  %152 = vmatpush1.msra.mxu0 %v119
  %153 = vmatprep.subr.mxu0 0.0
  %154 = vmatpush1.msra.mxu0 %v120
  %155 = vmatprep.subr.mxu0 0.0
  %156 = vmatpush1.msra.mxu0 %v121
  %157 = vmatprep.subr.mxu0 0.0
  %158 = vmatpush1.msra.mxu0 %v122
  %159 = vmatprep.subr.mxu0 0.0
  %160 = vmatpush1.msra.mxu0 %v123
  %161 = vmatprep.subr.mxu0 0.0
  %162 = vmatpush1.msra.mxu0 %v124
  %163 = vmatprep.subr.mxu0 0.0
  %164 = vmatpush1.msra.mxu0 %v125
  %165 = vmatprep.subr.mxu0 0.0
  %166 = vmatpush1.msra.mxu0 0.0
  %167 = vmatprep.subr.mxu0 0.0
  %168 = vmatpush1.msra.mxu0 0.0
  %169 = vmatprep.subr.mxu0 0.0
  %170 = vmatpush1.msra.mxu0 0.0
  %171 = vmatprep.subr.mxu0 0.0
  %172 = vmatpush1.msra.mxu0 0.0
  %173 = vmatprep.subr.mxu0 0.0
  %174 = vmatpush1.msra.mxu0 0.0
  %175 = vmatprep.subr.mxu0 0.0
  %176 = vmatpush1.msra.mxu0 0.0
  %177 = vmatprep.subr.mxu0 0.0
  %178 = vmatpush1.msra.mxu0 0.0
  %179 = vmatprep.subr.mxu0 0.0
  %180 = vmatpush1.msra.mxu0 0.0
  %181 = vmatprep.subr.mxu0 0.0
  %182 = vmatpush1.msra.mxu0 0.0
  %183 = vmatprep.subr.mxu0 0.0
  %184 = vmatpush1.msra.mxu0 0.0
  %185 = vmatprep.subr.mxu0 0.0
  %186 = vmatpush1.msra.mxu0 0.0
  %187 = vmatprep.subr.mxu0 0.0
  %188 = vmatpush1.msra.mxu0 0.0
  %189 = vmatprep.subr.mxu0 0.0
  %190 = vmatpush1.msra.mxu0 0.0
  %191 = vmatprep.subr.mxu0 0.0
  %192 = vmatpush1.msra.mxu0 0.0
  %193 = vmatprep.subr.mxu0 0.0
  %194 = vmatpush1.msra.mxu0 0.0
  %195 = vmatprep.subr.mxu0 0.0
  %196 = vmatpush1.msra.mxu0 0.0
  %197 = vmatprep.mubr.f32.mxu0 0.0
  %198 = vmatmul.mubr.f32.gmra.mrb[0].mxu0 %v109
  %v199 = vpop.f32.mrb[0].mxu0
  %v200 = vadd.f32 %v131, %v199
  %v201 = vpop.f32.mrb[0].mxu0
  %202 = vdwg.mxu0
  %v203 = vmax.f32 %v200, 0.0
  %v204 = vld [vmem:[%s5] sm:$0xff]
  %v205 = vld [vmem:[%s5 + $0x8] sm:$0xff]
  %v206 = vld [vmem:[%s5 + $0x10] sm:$0xff]
  %v207 = vld [vmem:[%s5 + $0x18] sm:$0xff]
  %v208 = vld [vmem:[%s5 + $0x20] sm:$0xff]
  %v209 = vld [vmem:[%s5 + $0x28] sm:$0xff]
  %v210 = vld [vmem:[%s5 + $0x30] sm:$0xff]
  %v211 = vld [vmem:[%s5 + $0x38] sm:$0xff]
  %v212 = vld [vmem:[%s5 + $0x40] sm:$0xff]
  %v213 = vld [vmem:[%s5 + $0x48] sm:$0xff]
  %v214 = vld [vmem:[%s5 + $0x50] sm:$0xff]
  %v215 = vld [vmem:[%s5 + $0x58] sm:$0xff]
  %v216 = vld [vmem:[%s5 + $0x60] sm:$0xff]
  %v217 = vld [vmem:[%s5 + $0x68] sm:$0xff]
  %v218 = vld [vmem:[%s5 + $0x70] sm:$0xff]
  %v219 = vld [vmem:[%s5 + $0x78] sm:$0xff]
  %v220 = vld [vmem:[%s6] sm:$0x1]
  %v222 = vlaneseq
  %v223 = vshrl.u32 %v222, 7
  %v224 = vsub.s32 0, %v223
  %v225 = vrot.slane %v220, %v224
  %227 = vmatprep.subr.mxu0 0.0
  %228 = vmatpush1.msra.mxu0 %v204
  %229 = vmatprep.subr.mxu0 0.0
  %230 = vmatpush1.msra.mxu0 %v205
  %231 = vmatprep.subr.mxu0 0.0
  %232 = vmatpush1.msra.mxu0 %v206
  %233 = vmatprep.subr.mxu0 0.0
  %234 = vmatpush1.msra.mxu0 %v207
  %235 = vmatprep.subr.mxu0 0.0
  %236 = vmatpush1.msra.mxu0 %v208
  %237 = vmatprep.subr.mxu0 0.0
  %238 = vmatpush1.msra.mxu0 %v209
  %239 = vmatprep.subr.mxu0 0.0
  %240 = vmatpush1.msra.mxu0 %v210
  %241 = vmatprep.subr.mxu0 0.0
  %242 = vmatpush1.msra.mxu0 %v211
  %243 = vmatprep.subr.mxu0 0.0
  %244 = vmatpush1.msra.mxu0 %v212
  %245 = vmatprep.subr.mxu0 0.0
  %246 = vmatpush1.msra.mxu0 %v213
  %247 = vmatprep.subr.mxu0 0.0
  %248 = vmatpush1.msra.mxu0 %v214
  %249 = vmatprep.subr.mxu0 0.0
  %250 = vmatpush1.msra.mxu0 %v215
  %251 = vmatprep.subr.mxu0 0.0
  %252 = vmatpush1.msra.mxu0 %v216
  %253 = vmatprep.subr.mxu0 0.0
  %254 = vmatpush1.msra.mxu0 %v217
  %255 = vmatprep.subr.mxu0 0.0
  %256 = vmatpush1.msra.mxu0 %v218
  %257 = vmatprep.subr.mxu0 0.0
  %258 = vmatpush1.msra.mxu0 %v219
  %259 = vmatprep.subr.mxu0 0.0
  %260 = vmatpush1.msra.mxu0 0.0
  %261 = vmatprep.subr.mxu0 0.0
  %262 = vmatpush1.msra.mxu0 0.0
  %263 = vmatprep.subr.mxu0 0.0
  %264 = vmatpush1.msra.mxu0 0.0
  %265 = vmatprep.subr.mxu0 0.0
  %266 = vmatpush1.msra.mxu0 0.0
  %267 = vmatprep.subr.mxu0 0.0
  %268 = vmatpush1.msra.mxu0 0.0
  %269 = vmatprep.subr.mxu0 0.0
  %270 = vmatpush1.msra.mxu0 0.0
  %271 = vmatprep.subr.mxu0 0.0
  %272 = vmatpush1.msra.mxu0 0.0
  %273 = vmatprep.subr.mxu0 0.0
  %274 = vmatpush1.msra.mxu0 0.0
  %275 = vmatprep.subr.mxu0 0.0
  %276 = vmatpush1.msra.mxu0 0.0
  %277 = vmatprep.subr.mxu0 0.0
  %278 = vmatpush1.msra.mxu0 0.0
  %279 = vmatprep.subr.mxu0 0.0
  %280 = vmatpush1.msra.mxu0 0.0
  %281 = vmatprep.subr.mxu0 0.0
  %282 = vmatpush1.msra.mxu0 0.0
  %283 = vmatprep.subr.mxu0 0.0
  %284 = vmatpush1.msra.mxu0 0.0
  %285 = vmatprep.subr.mxu0 0.0
  %286 = vmatpush1.msra.mxu0 0.0
  %287 = vmatprep.subr.mxu0 0.0
  %288 = vmatpush1.msra.mxu0 0.0
  %289 = vmatprep.subr.mxu0 0.0
  %290 = vmatpush1.msra.mxu0 0.0
  %291 = vmatprep.mubr.f32.mxu0 0.0
  %292 = vmatmul.mubr.f32.gmra.mrb[0].mxu0 %v203
  %v293 = vpop.f32.mrb[0].mxu0
  %v294 = vadd.f32 %v225, %v293
  %v295 = vpop.f32.mrb[0].mxu0
  %296 = vdwg.mxu0
  %vm297 = vcmask 31744
  %298 = vst.msk [vmem:[%s7] sm:$0xff] %vm297, %v294
  // Predicated region
  $region30: #{actor_forward.1} parent=0 // pred_check
    _
  $region31: #{actor_forward.1} parent=0 // pred_check_branch
    %300 = sbr.rel (0) target = $region33
  $region32: #{actor_forward.1} parent=0 // pred_region
    _
  $region33: #{actor_forward.1} parent=0 // pred_fallthru
    _
  // Predicated region
  $region34: #{actor_forward.1} parent=0 // pred_check
    _
  $region35: #{actor_forward.1} parent=0 // pred_check_branch
    %302 = sbr.rel (0) target = $region37
  $region36: #{actor_forward.1} parent=0 // pred_region
    _
  $region37: #{actor_forward.1} parent=0 // pred_fallthru
    _

</llo_original>
